<compile_context>
chip_gen: v5e
topology: v5e:2x2
jax: 0.10.0
libtpu: 0.0.40
codegen_flags: <defaults>
</compile_context>

<pallas_src>
import functools
import math

import jax
import jax.numpy as jnp
from jax.experimental import pallas as pl
from jax.experimental.pallas import tpu as pltpu

LANE = 128          # TPU lane width: all feature dims padded to this.
SUBLANE = 8         # f32 sublane height.
_GRID_BATCH = 512   # switch to the 1-D batch grid at/above this batch size
_TB = 512           # batch tile for the gridded path (256 KiB f32 activations)


def _round_up(n: int, m: int) -> int:
    return (n + m - 1) // m * m


def _make_mlp_kernel(num_layers: int, obs_dim: int, action_dims: int):
    """Fused MLP kernel: (x_ref, w_ref, b_ref, out_ref).

    x_ref:   [B, obs_dim]       f32 (raw, un-padded input)
    w_ref:   [L, LANE, LANE]    bf16, pre-transposed to [in, out], zero-padded
    b_ref:   [L, 1, LANE]       f32, zero-padded
    out_ref: [B, action_dims]   f32
    ReLU after every layer except the last (matches nn.Sequential in the spec).
    """

    def kernel(x_ref, w_ref, b_ref, out_ref):
        # First layer: dot the raw input against the first obs_dim rows of the
        # zero-padded weight -- mathematically identical to zero-padding x, but
        # with no wrapper-side pad op.
        x = x_ref[...].astype(jnp.float32).astype(jnp.bfloat16)
        h = jnp.dot(x, w_ref[0][:obs_dim, :],
                    preferred_element_type=jnp.float32) + b_ref[0]
        h = jnp.maximum(h, 0.0)                                  # nn.ReLU()
        for i in range(1, num_layers):                           # static unroll
            h = jnp.dot(h.astype(jnp.bfloat16), w_ref[i],
                        preferred_element_type=jnp.float32) + b_ref[i]
            if i < num_layers - 1:
                h = jnp.maximum(h, 0.0)
        # Lane-slice to the real action dims in-kernel (no follow-on slice HLO).
        out_ref[...] = h[:, :action_dims].astype(out_ref.dtype)

    return kernel


def pack_params(params, weight_dtype=jnp.bfloat16):
    """One-time layout step (call at parameter init, NOT per forward).

    params: list of (W_pt, b) with W_pt shaped [out, in] (PyTorch convention).
    Returns:
      w_packed: [L, LANE, LANE] weight_dtype, W transposed to [in, out], zero-padded.
      b_packed: [L, 1, LANE] f32, zero-padded.
    """
    num_layers = len(params)
    w_packed = jnp.zeros((num_layers, LANE, LANE), weight_dtype)
    b_packed = jnp.zeros((num_layers, 1, LANE), jnp.float32)
    for i, (w_pt, b) in enumerate(params):
        w = jnp.asarray(w_pt, jnp.float32).T                     # [in, out]
        fi, fo = w.shape
        assert fi <= LANE and fo <= LANE, "feature dims must be <= 128"
        w_packed = w_packed.at[i, :fi, :fo].set(w.astype(weight_dtype))
        b_packed = b_packed.at[i, 0, :fo].set(jnp.asarray(b, jnp.float32))
    return w_packed, b_packed


@functools.partial(jax.jit, static_argnames=("action_dims",))
def variable_dqn_forward(x, w_packed, b_packed, *, action_dims: int):
    """Forward pass. Gridless single block for small (act-path) batches;
    1-D batch grid with VMEM-resident weights for training-sized batches."""
    num_layers = w_packed.shape[0]
    batch, obs_dim = x.shape
    x = x.astype(jnp.float32)                                    # x.float()
    kernel = _make_mlp_kernel(num_layers, obs_dim, action_dims)

    if batch < _GRID_BATCH:
        # Gridless whole-array call: 3 input DMAs, 1 tiny output DMA, no wrapper
        # pad / slice ops.
        vmem = pl.BlockSpec(memory_space=pltpu.MemorySpace.VMEM)
        return pl.pallas_call(
            kernel,
            out_shape=jax.ShapeDtypeStruct((batch, action_dims), jnp.float32),
            in_specs=[vmem, vmem, vmem],
            out_specs=vmem,
        )(x, w_packed, b_packed)

    # Training-sized batch: 1-D grid over the batch axis. Weight/bias blocks are
    # constant (block (0,0,0)) so the packed slab stays VMEM-resident; the batch
    # axis is "parallel" so v7x's two TensorCores both get used.
    b_pad = _round_up(batch, _TB)
    if b_pad != batch:
        x = jnp.pad(x, ((0, b_pad - batch), (0, 0)))
    out = pl.pallas_call(
        kernel,
        out_shape=jax.ShapeDtypeStruct((b_pad, action_dims), jnp.float32),
        grid=(b_pad // _TB,),
        in_specs=[
            pl.BlockSpec((_TB, obs_dim), lambda i: (i, 0)),
            pl.BlockSpec((num_layers, LANE, LANE), lambda i: (0, 0, 0)),
            pl.BlockSpec((num_layers, 1, LANE), lambda i: (0, 0, 0)),
        ],
        out_specs=pl.BlockSpec((_TB, action_dims), lambda i: (i, 0)),
        compiler_params=pltpu.CompilerParams(
            dimension_semantics=("parallel",)),
    )(x, w_packed, b_packed)
    if b_pad != batch:
        out = out[:batch]
    return out


# ----------------------------- test / reference ------------------------------

def _init_linear(key, fan_in, fan_out):
    """Mimics PyTorch nn.Linear default init (uniform +/- 1/sqrt(fan_in))."""
    kw, kb = jax.random.split(key)
    bound = 1.0 / math.sqrt(fan_in)
    w = jax.random.uniform(kw, (fan_out, fan_in), jnp.float32, -bound, bound)
    b = jax.random.uniform(kb, (fan_out,), jnp.float32, -bound, bound)
    return w, b


def _reference_forward_f32(x, params):
    """Pure-f32 reference matching the PyTorch module."""
    h = x.astype(jnp.float32)
    for i, (w, b) in enumerate(params):
        h = h @ w.T + b
        if i < len(params) - 1:
            h = jnp.maximum(h, 0.0)
    return h


def _reference_forward_packed(x, w_packed, b_packed, action_dims):
    """Pure-JAX reference performing the identical packed bf16-weight computation."""
    obs_dim = x.shape[1]
    num_layers = w_packed.shape[0]
    h0 = x.astype(jnp.float32).astype(jnp.bfloat16)
    h = jnp.dot(h0, w_packed[0][:obs_dim, :],
                preferred_element_type=jnp.float32) + b_packed[0]
    h = jnp.maximum(h, 0.0)
    for i in range(1, num_layers):
        h = jnp.dot(h.astype(jnp.bfloat16), w_packed[i],
                    preferred_element_type=jnp.float32) + b_packed[i]
        if i < num_layers - 1:
            h = jnp.maximum(h, 0.0)
    return h[:, :action_dims]


if __name__ == "__main__":
    # VariableDQN(obs_dims=[16], action_dims=4, hWidth=32, hDepth=2, lr=1e-3)
    obs_dim = 16
    action_dims = 4
    h_width = 32
    h_depth = 2

    key = jax.random.PRNGKey(0)
    keys = jax.random.split(key, h_depth + 4)

    params = []
    params.append(_init_linear(keys[0], obs_dim, h_width))                # Linear(obs, hWidth)
    for l in range(h_depth):
        params.append(_init_linear(keys[1 + l], h_width, h_width))        # Linear(hWidth, hWidth)
    params.append(_init_linear(keys[1 + h_depth], h_width, action_dims))  # Linear(hWidth, actions)

    # One-time parameter packing (init-time layout, not in the hot path).
    w_packed, b_packed = pack_params(params, weight_dtype=jnp.bfloat16)

    # --- Small act-path batch: gridless single-block kernel ------------------
    batch = 8
    x = jax.random.normal(keys[-2], (batch, obs_dim), jnp.float32)
    out = jax.block_until_ready(
        variable_dqn_forward(x, w_packed, b_packed, action_dims=action_dims))
    assert out.shape == (batch, action_dims)
    ref_packed = _reference_forward_packed(x, w_packed, b_packed, action_dims)
    assert jnp.allclose(out, ref_packed, atol=1e-3, rtol=1e-3), \
        "small-batch mismatch vs. packed bf16 reference"
    ref_f32 = _reference_forward_f32(x, params)
    assert jnp.allclose(out, ref_f32, atol=5e-2, rtol=5e-2), \
        "small-batch mismatch vs. f32 reference beyond bf16 tolerance"

    # --- Training-sized batch: 1-D batch grid, VMEM-resident weights ---------
    big_batch = 1024
    x_big = jax.random.normal(keys[-1], (big_batch, obs_dim), jnp.float32)
    out_big = jax.block_until_ready(
        variable_dqn_forward(x_big, w_packed, b_packed, action_dims=action_dims))
    assert out_big.shape == (big_batch, action_dims)
    ref_packed_big = _reference_forward_packed(x_big, w_packed, b_packed, action_dims)
    assert jnp.allclose(out_big, ref_packed_big, atol=1e-3, rtol=1e-3), \
        "gridded mismatch vs. packed bf16 reference"
    ref_f32_big = _reference_forward_f32(x_big, params)
    assert jnp.allclose(out_big, ref_f32_big, atol=1e-1, rtol=1e-1), \
        "gridded mismatch vs. f32 reference beyond bf16 tolerance"

    print("KERNEL_OK")
</pallas_src>

<mosaic_0001>
module attributes {stable_mosaic.version = 11 : i64} {
  func.func @kernel(%arg0: memref<8x16xf32, #tpu.memory_space<vmem>>, %arg1: memref<4x128x128xbf16, #tpu.memory_space<vmem>>, %arg2: memref<4x1x128xf32, #tpu.memory_space<vmem>>, %arg3: memref<8x4xf32, #tpu.memory_space<vmem>>) attributes {dimension_semantics = [], scalar_prefetch = 0 : i64, scratch_operands = 0 : i64, tpu.core_type = #tpu.core_type<tc>} {
    %c0 = arith.constant 0 : index
    %c0_0 = arith.constant 0 : index
    %0 = vector.load %arg0[%c0, %c0_0] : memref<8x16xf32, #tpu.memory_space<vmem>>, vector<8x16xf32>
    %1 = arith.truncf %0 : vector<8x16xf32> to vector<8x16xbf16>
    %c0_1 = arith.constant 0 : index
    %c0_2 = arith.constant 0 : index
    %c0_3 = arith.constant 0 : index
    %2 = vector.load %arg1[%c0_1, %c0_2, %c0_3] : memref<4x128x128xbf16, #tpu.memory_space<vmem>>, vector<1x128x128xbf16>
    %3 = vector.shape_cast %2 : vector<1x128x128xbf16> to vector<128x128xbf16>
    %4 = vector.extract_strided_slice %3 {offsets = [0, 0], sizes = [16, 128], strides = [1, 1]} : vector<128x128xbf16> to vector<16x128xbf16>
    %cst = arith.constant dense<0.000000e+00> : vector<8x128xf32>
    %5 = tpu.matmul %1, %4, %cst {dimension_numbers = #tpu.dot_dimension_numbers<[1], [0], [0], [1], [0, 0, 1, 1], [], []>} : vector<8x16xbf16>, vector<16x128xbf16>, vector<8x128xf32> -> vector<8x128xf32>
    %c0_4 = arith.constant 0 : index
    %c0_5 = arith.constant 0 : index
    %c0_6 = arith.constant 0 : index
    %6 = vector.load %arg2[%c0_4, %c0_5, %c0_6] : memref<4x1x128xf32, #tpu.memory_space<vmem>>, vector<1x1x128xf32>
    %7 = vector.shape_cast %6 : vector<1x1x128xf32> to vector<1x128xf32>
    %8 = vector.broadcast %7 : vector<1x128xf32> to vector<8x128xf32>
    %9 = arith.addf %5, %8 : vector<8x128xf32>
    %cst_7 = arith.constant 0.000000e+00 : f32
    %10 = vector.broadcast %cst_7 : f32 to vector<8x128xf32>
    %11 = arith.maximumf %9, %10 : vector<8x128xf32>
    %12 = arith.truncf %11 : vector<8x128xf32> to vector<8x128xbf16>
    %c1 = arith.constant 1 : index
    %c0_8 = arith.constant 0 : index
    %c0_9 = arith.constant 0 : index
    %13 = vector.load %arg1[%c1, %c0_8, %c0_9] : memref<4x128x128xbf16, #tpu.memory_space<vmem>>, vector<1x128x128xbf16>
    %14 = vector.shape_cast %13 : vector<1x128x128xbf16> to vector<128x128xbf16>
    %cst_10 = arith.constant dense<0.000000e+00> : vector<8x128xf32>
    %15 = tpu.matmul %12, %14, %cst_10 {dimension_numbers = #tpu.dot_dimension_numbers<[1], [0], [0], [1], [0, 0, 1, 1], [], []>} : vector<8x128xbf16>, vector<128x128xbf16>, vector<8x128xf32> -> vector<8x128xf32>
    %c1_11 = arith.constant 1 : index
    %c0_12 = arith.constant 0 : index
    %c0_13 = arith.constant 0 : index
    %16 = vector.load %arg2[%c1_11, %c0_12, %c0_13] : memref<4x1x128xf32, #tpu.memory_space<vmem>>, vector<1x1x128xf32>
    %17 = vector.shape_cast %16 : vector<1x1x128xf32> to vector<1x128xf32>
    %18 = vector.broadcast %17 : vector<1x128xf32> to vector<8x128xf32>
    %19 = arith.addf %15, %18 : vector<8x128xf32>
    %cst_14 = arith.constant 0.000000e+00 : f32
    %20 = vector.broadcast %cst_14 : f32 to vector<8x128xf32>
    %21 = arith.maximumf %19, %20 : vector<8x128xf32>
    %22 = arith.truncf %21 : vector<8x128xf32> to vector<8x128xbf16>
    %c2 = arith.constant 2 : index
    %c0_15 = arith.constant 0 : index
    %c0_16 = arith.constant 0 : index
    %23 = vector.load %arg1[%c2, %c0_15, %c0_16] : memref<4x128x128xbf16, #tpu.memory_space<vmem>>, vector<1x128x128xbf16>
    %24 = vector.shape_cast %23 : vector<1x128x128xbf16> to vector<128x128xbf16>
    %cst_17 = arith.constant dense<0.000000e+00> : vector<8x128xf32>
    %25 = tpu.matmul %22, %24, %cst_17 {dimension_numbers = #tpu.dot_dimension_numbers<[1], [0], [0], [1], [0, 0, 1, 1], [], []>} : vector<8x128xbf16>, vector<128x128xbf16>, vector<8x128xf32> -> vector<8x128xf32>
    %c2_18 = arith.constant 2 : index
    %c0_19 = arith.constant 0 : index
    %c0_20 = arith.constant 0 : index
    %26 = vector.load %arg2[%c2_18, %c0_19, %c0_20] : memref<4x1x128xf32, #tpu.memory_space<vmem>>, vector<1x1x128xf32>
    %27 = vector.shape_cast %26 : vector<1x1x128xf32> to vector<1x128xf32>
    %28 = vector.broadcast %27 : vector<1x128xf32> to vector<8x128xf32>
    %29 = arith.addf %25, %28 : vector<8x128xf32>
    %cst_21 = arith.constant 0.000000e+00 : f32
    %30 = vector.broadcast %cst_21 : f32 to vector<8x128xf32>
    %31 = arith.maximumf %29, %30 : vector<8x128xf32>
    %32 = arith.truncf %31 : vector<8x128xf32> to vector<8x128xbf16>
    %c3 = arith.constant 3 : index
    %c0_22 = arith.constant 0 : index
    %c0_23 = arith.constant 0 : index
    %33 = vector.load %arg1[%c3, %c0_22, %c0_23] : memref<4x128x128xbf16, #tpu.memory_space<vmem>>, vector<1x128x128xbf16>
    %34 = vector.shape_cast %33 : vector<1x128x128xbf16> to vector<128x128xbf16>
    %cst_24 = arith.constant dense<0.000000e+00> : vector<8x128xf32>
    %35 = tpu.matmul %32, %34, %cst_24 {dimension_numbers = #tpu.dot_dimension_numbers<[1], [0], [0], [1], [0, 0, 1, 1], [], []>} : vector<8x128xbf16>, vector<128x128xbf16>, vector<8x128xf32> -> vector<8x128xf32>
    %c3_25 = arith.constant 3 : index
    %c0_26 = arith.constant 0 : index
    %c0_27 = arith.constant 0 : index
    %36 = vector.load %arg2[%c3_25, %c0_26, %c0_27] : memref<4x1x128xf32, #tpu.memory_space<vmem>>, vector<1x1x128xf32>
    %37 = vector.shape_cast %36 : vector<1x1x128xf32> to vector<1x128xf32>
    %38 = vector.broadcast %37 : vector<1x128xf32> to vector<8x128xf32>
    %39 = arith.addf %35, %38 : vector<8x128xf32>
    %40 = vector.extract_strided_slice %39 {offsets = [0, 0], sizes = [8, 4], strides = [1, 1]} : vector<8x128xf32> to vector<8x4xf32>
    %c0_28 = arith.constant 0 : index
    %c0_29 = arith.constant 0 : index
    %41 = vector.load %arg3[%c0_28, %c0_29] : memref<8x4xf32, #tpu.memory_space<vmem>>, vector<8x4xf32>
    tpu.vector_store %arg3[%c0_28, %c0_29], %40 {strides = array<i32>} : memref<8x4xf32, #tpu.memory_space<vmem>>, vector<8x4xf32>,
    return
  }
}

</mosaic_0001>

<llo_original>
// kernel: variable_dqn_forward.1
$region0: #{variable_dqn_forward.1}
  #allocation0 [shape = 'u32[]', space=smem, size = 0x4, offset = 0x4, fixed_abs, tag = 'smem constant byte address 0x4 - core index']
  #allocation1 [shape = 'u32[72,128]{1,0:T(1,128)}', space=vmem, size = 0x9000, scoped, tag = 'internal scratch']
  %s0 = inlined_call_operand.hbm [shape: f32[8,16], index: 0, kind: input, shape index: {}]
  %s1 = inlined_call_operand.hbm [shape: bf16[4,128,128], index: 1, kind: input, shape index: {}]
  %s2 = inlined_call_operand.hbm [shape: f32[4,1,128], index: 2, kind: input, shape index: {}]
  %s3 = inlined_call_operand.vmem [shape: f32[8,4], index: 3, kind: output, shape index: {}]
  %s4 = sld [smem:[#allocation0]]
  $region34: #{variable_dqn_forward.1} parent=0
    _
  %s6 = ssub.s32 1, %s4
  %s7 = scalar_select 0, %s6, %s4
  $region1: #{variable_dqn_forward.1} parent=0
    #allocation2 [shape = 'u8[4096]{0}', space=vmem, size = 0x1000, scoped, tag = 'input window, operand 0, single buffered']
    #allocation3 [shape = 's32[1]{0}', space=sflag, size = 0x4, scoped, tag = 'scoped memory for variable_dqn_forward.1']
    #allocation4 [shape = 'u8[131072]{0}', space=vmem, size = 0x20000, scoped, tag = 'input window, operand 1, single buffered']
    #allocation5 [shape = 's32[1]{0}', space=sflag, size = 0x4, scoped, tag = 'scoped memory for variable_dqn_forward.1']
    #allocation6 [shape = 'u8[2048]{0}', space=vmem, size = 0x800, scoped, tag = 'input window, operand 2, single buffered']
    %8 = vsyncpa [#allocation3], 0
    %9 = vsyncpa [#allocation5], 0
    // Predicated region
    $region2: #{variable_dqn_forward.1} parent=1 // pred_check
      _
    $region3: #{variable_dqn_forward.1} parent=1 // pred_check_branch
      %11 = sbr.rel (0) target = $region5
    $region4: #{variable_dqn_forward.1} parent=1 // pred_region
      %13 = vsyncadd [#allocation3], 0
      %s15 = sshll.u32 %s0, 4
      %s16 = int_to_ptr.hbm [resolvable:$true] %s15
      %s17 = sshll.u32 [#allocation2], 4
      %s18 = int_to_ptr.vmem [resolvable:$true] %s17
      %20 = dma.hbm_to_vmem [thread:$0]  %s16, 128, %s18, [#allocation3]
    $region5: #{variable_dqn_forward.1} parent=1 // pred_fallthru
      _
    // Predicated region
    $region6: #{variable_dqn_forward.1} parent=1 // pred_check
      _
    $region7: #{variable_dqn_forward.1} parent=1 // pred_check_branch
      %22 = sbr.rel (0) target = $region9
    $region8: #{variable_dqn_forward.1} parent=1 // pred_region
      %24 = vsyncadd [#allocation5], 0
      %s25 = sshll.u32 %s1, 4
      %s26 = int_to_ptr.hbm [resolvable:$true] %s25
      %s27 = sshll.u32 [#allocation4], 4
      %s28 = int_to_ptr.vmem [resolvable:$true] %s27
      %33 = dma.hbm_to_vmem [thread:$0]  %s26, 4096, %s28, [#allocation5], 64, 64, 4
    $region9: #{variable_dqn_forward.1} parent=1 // pred_fallthru
      _
    // Predicated region
    $region10: #{variable_dqn_forward.1} parent=1 // pred_check
      _
    $region11: #{variable_dqn_forward.1} parent=1 // pred_check_branch
      %35 = sbr.rel (0) target = $region13
    $region12: #{variable_dqn_forward.1} parent=1 // pred_region
      %37 = vsyncadd [#allocation5], 0
      %s38 = sshll.u32 %s2, 4
      %s39 = int_to_ptr.hbm [resolvable:$true] %s38
      %s40 = sshll.u32 [#allocation6], 4
      %s41 = int_to_ptr.vmem [resolvable:$true] %s40
      %46 = dma.hbm_to_vmem [thread:$0]  %s39, 64, %s41, [#allocation5], 16, 16, 1
    $region13: #{variable_dqn_forward.1} parent=1 // pred_fallthru
      _
    // Predicated region
    $region14: #{variable_dqn_forward.1} parent=1 // pred_check
      _
    $region15: #{variable_dqn_forward.1} parent=1 // pred_check_branch
      %48 = sbr.rel (0) target = $region17
    $region16: #{variable_dqn_forward.1} parent=1 // pred_region
      %50 = dma.done [#allocation3], 128
    $region17: #{variable_dqn_forward.1} parent=1 // pred_fallthru
      _
    // Predicated region
    $region18: #{variable_dqn_forward.1} parent=1 // pred_check
      _
    $region19: #{variable_dqn_forward.1} parent=1 // pred_check_branch
      %52 = sbr.rel (0) target = $region21
    $region20: #{variable_dqn_forward.1} parent=1 // pred_region
      %54 = dma.done [#allocation5], 4096
    $region21: #{variable_dqn_forward.1} parent=1 // pred_fallthru
      _
    // Predicated region
    $region22: #{variable_dqn_forward.1} parent=1 // pred_check
      _
    $region23: #{variable_dqn_forward.1} parent=1 // pred_check_branch
      %56 = sbr.rel (0) target = $region25
    $region24: #{variable_dqn_forward.1} parent=1 // pred_region
      %58 = dma.done [#allocation5], 64
    $region25: #{variable_dqn_forward.1} parent=1 // pred_fallthru
      _
    %v60 = vld [vmem:[#allocation2] sm:$0xff]
    %v61 = vpack.c.bf16 %v60, %v60
    %v62 = vld [vmem:[#allocation4] sm:$0xf]
    %v63 = vld [vmem:[#allocation4 + $0x4] sm:$0xf]
    %v64 = vld [vmem:[#allocation6] sm:$0x1]
    %v66 = vperm.slane %v64, 0
    %v70 = vunpack.c.l.b16 %v62
    %v71 = vunpack.c.l.b16 %v63
    %v72 = vpack.c.b16 %v71, %v70
    %vm74 = vcmask 130048
    %v76 = vsel %vm74, %v61, 0
    %78 = vmatpush.bf16.msra.mxu0 0
    %79 = vmatpush.bf16.msra.mxu0 0
    %80 = vmatpush.bf16.msra.mxu0 0
    %81 = vmatpush.bf16.msra.mxu0 0
    %82 = vmatpush.bf16.msra.mxu0 0
    %83 = vmatpush.bf16.msra.mxu0 0
    %84 = vmatpush.bf16.msra.mxu0 0
    %85 = vmatpush.bf16.msra.mxu0 %v72
    %86 = vmatmul.bf16.gmra.mxu0 %v76
    %v87 = vpop.f32.mrf.mxu0
    %v88 = vadd.f32 %v66, %v87
    %v89 = vpop.f32.mrf.mxu0
    %90 = vdwg.mxu0
    %v91 = vmax.f32 %v88, 0.0
    %v92 = vpack.c.bf16 %v91, %v91
    %s93 = scalar_lea.vmem [#allocation4], 64
    %v94 = vld [vmem:[%s93] sm:$0xf]
    %v95 = vld [vmem:[%s93 + $0x4] sm:$0xf]
    %v96 = vld [vmem:[%s93 + $0x8] sm:$0xf]
    %v97 = vld [vmem:[%s93 + $0xc] sm:$0xf]
    %v98 = vld [vmem:[%s93 + $0x10] sm:$0xf]
    %v99 = vld [vmem:[%s93 + $0x14] sm:$0xf]
    %v100 = vld [vmem:[%s93 + $0x18] sm:$0xf]
    %v101 = vld [vmem:[%s93 + $0x1c] sm:$0xf]
    %v102 = vld [vmem:[%s93 + $0x20] sm:$0xf]
    %v103 = vld [vmem:[%s93 + $0x24] sm:$0xf]
    %v104 = vld [vmem:[%s93 + $0x28] sm:$0xf]
    %v105 = vld [vmem:[%s93 + $0x2c] sm:$0xf]
    %v106 = vld [vmem:[%s93 + $0x30] sm:$0xf]
    %v107 = vld [vmem:[%s93 + $0x34] sm:$0xf]
    %v108 = vld [vmem:[%s93 + $0x38] sm:$0xf]
    %v109 = vld [vmem:[%s93 + $0x3c] sm:$0xf]
    %s110 = scalar_lea.vmem [#allocation6], 1
    %v111 = vld [vmem:[%s110] sm:$0x1]
    %v113 = vperm.slane %v111, 0
    %v131 = vunpack.c.l.b16 %v94
    %v132 = vunpack.c.l.b16 %v95
    %v133 = vunpack.c.l.b16 %v96
    %v134 = vunpack.c.l.b16 %v97
    %v135 = vunpack.c.l.b16 %v98
    %v136 = vunpack.c.l.b16 %v99
    %v137 = vunpack.c.l.b16 %v100
    %v138 = vunpack.c.l.b16 %v101
    %v139 = vunpack.c.l.b16 %v102
    %v140 = vunpack.c.l.b16 %v103
    %v141 = vunpack.c.l.b16 %v104
    %v142 = vunpack.c.l.b16 %v105
    %v143 = vunpack.c.l.b16 %v106
    %v144 = vunpack.c.l.b16 %v107
    %v145 = vunpack.c.l.b16 %v108
    %v146 = vunpack.c.l.b16 %v109
    %v147 = vpack.c.b16 %v132, %v131
    %v148 = vpack.c.b16 %v134, %v133
    %v149 = vpack.c.b16 %v136, %v135
    %v150 = vpack.c.b16 %v138, %v137
    %v151 = vpack.c.b16 %v140, %v139
    %v152 = vpack.c.b16 %v142, %v141
    %v153 = vpack.c.b16 %v144, %v143
    %v154 = vpack.c.b16 %v146, %v145
    %163 = vmatpush.bf16.msra.mxu0 %v154
    %164 = vmatpush.bf16.msra.mxu0 %v153
    %165 = vmatpush.bf16.msra.mxu0 %v152
    %166 = vmatpush.bf16.msra.mxu0 %v151
    %167 = vmatpush.bf16.msra.mxu0 %v150
    %168 = vmatpush.bf16.msra.mxu0 %v149
    %169 = vmatpush.bf16.msra.mxu0 %v148
    %170 = vmatpush.bf16.msra.mxu0 %v147
    %171 = vmatmul.bf16.gmra.mxu0 %v92
    %v172 = vpop.f32.mrf.mxu0
    %v173 = vadd.f32 %v113, %v172
    %v174 = vpop.f32.mrf.mxu0
    %175 = vdwg.mxu0
    %v176 = vmax.f32 %v173, 0.0
    %v177 = vpack.c.bf16 %v176, %v176
    %s178 = scalar_lea.vmem [#allocation4], 128
    %v179 = vld [vmem:[%s178] sm:$0xf]
    %v180 = vld [vmem:[%s178 + $0x4] sm:$0xf]
    %v181 = vld [vmem:[%s178 + $0x8] sm:$0xf]
    %v182 = vld [vmem:[%s178 + $0xc] sm:$0xf]
    %v183 = vld [vmem:[%s178 + $0x10] sm:$0xf]
    %v184 = vld [vmem:[%s178 + $0x14] sm:$0xf]
    %v185 = vld [vmem:[%s178 + $0x18] sm:$0xf]
    %v186 = vld [vmem:[%s178 + $0x1c] sm:$0xf]
    %v187 = vld [vmem:[%s178 + $0x20] sm:$0xf]
    %v188 = vld [vmem:[%s178 + $0x24] sm:$0xf]
    %v189 = vld [vmem:[%s178 + $0x28] sm:$0xf]
    %v190 = vld [vmem:[%s178 + $0x2c] sm:$0xf]
    %v191 = vld [vmem:[%s178 + $0x30] sm:$0xf]
    %v192 = vld [vmem:[%s178 + $0x34] sm:$0xf]
    %v193 = vld [vmem:[%s178 + $0x38] sm:$0xf]
    %v194 = vld [vmem:[%s178 + $0x3c] sm:$0xf]
    %s195 = scalar_lea.vmem [#allocation6], 2
    %v196 = vld [vmem:[%s195] sm:$0x1]
    %v198 = vperm.slane %v196, 0
    %v216 = vunpack.c.l.b16 %v179
    %v217 = vunpack.c.l.b16 %v180
    %v218 = vunpack.c.l.b16 %v181
    %v219 = vunpack.c.l.b16 %v182
    %v220 = vunpack.c.l.b16 %v183
    %v221 = vunpack.c.l.b16 %v184
    %v222 = vunpack.c.l.b16 %v185
    %v223 = vunpack.c.l.b16 %v186
    %v224 = vunpack.c.l.b16 %v187
    %v225 = vunpack.c.l.b16 %v188
    %v226 = vunpack.c.l.b16 %v189
    %v227 = vunpack.c.l.b16 %v190
    %v228 = vunpack.c.l.b16 %v191
    %v229 = vunpack.c.l.b16 %v192
    %v230 = vunpack.c.l.b16 %v193
    %v231 = vunpack.c.l.b16 %v194
    %v232 = vpack.c.b16 %v217, %v216
    %v233 = vpack.c.b16 %v219, %v218
    %v234 = vpack.c.b16 %v221, %v220
    %v235 = vpack.c.b16 %v223, %v222
    %v236 = vpack.c.b16 %v225, %v224
    %v237 = vpack.c.b16 %v227, %v226
    %v238 = vpack.c.b16 %v229, %v228
    %v239 = vpack.c.b16 %v231, %v230
    %248 = vmatpush.bf16.msra.mxu0 %v239
    %249 = vmatpush.bf16.msra.mxu0 %v238
    %250 = vmatpush.bf16.msra.mxu0 %v237
    %251 = vmatpush.bf16.msra.mxu0 %v236
    %252 = vmatpush.bf16.msra.mxu0 %v235
    %253 = vmatpush.bf16.msra.mxu0 %v234
    %254 = vmatpush.bf16.msra.mxu0 %v233
    %255 = vmatpush.bf16.msra.mxu0 %v232
    %256 = vmatmul.bf16.gmra.mxu0 %v177
    %v257 = vpop.f32.mrf.mxu0
    %v258 = vadd.f32 %v198, %v257
    %v259 = vpop.f32.mrf.mxu0
    %260 = vdwg.mxu0
    %v261 = vmax.f32 %v258, 0.0
    %v262 = vpack.c.bf16 %v261, %v261
    %s263 = scalar_lea.vmem [#allocation4], 192
    %v264 = vld [vmem:[%s263] sm:$0xf]
    %v265 = vld [vmem:[%s263 + $0x4] sm:$0xf]
    %v266 = vld [vmem:[%s263 + $0x8] sm:$0xf]
    %v267 = vld [vmem:[%s263 + $0xc] sm:$0xf]
    %v268 = vld [vmem:[%s263 + $0x10] sm:$0xf]
    %v269 = vld [vmem:[%s263 + $0x14] sm:$0xf]
    %v270 = vld [vmem:[%s263 + $0x18] sm:$0xf]
    %v271 = vld [vmem:[%s263 + $0x1c] sm:$0xf]
    %v272 = vld [vmem:[%s263 + $0x20] sm:$0xf]
    %v273 = vld [vmem:[%s263 + $0x24] sm:$0xf]
    %v274 = vld [vmem:[%s263 + $0x28] sm:$0xf]
    %v275 = vld [vmem:[%s263 + $0x2c] sm:$0xf]
    %v276 = vld [vmem:[%s263 + $0x30] sm:$0xf]
    %v277 = vld [vmem:[%s263 + $0x34] sm:$0xf]
    %v278 = vld [vmem:[%s263 + $0x38] sm:$0xf]
    %v279 = vld [vmem:[%s263 + $0x3c] sm:$0xf]
    %s280 = scalar_lea.vmem [#allocation6], 3
    %v281 = vld [vmem:[%s280] sm:$0x1]
    %v283 = vperm.slane %v281, 0
    %v301 = vunpack.c.l.b16 %v264
    %v302 = vunpack.c.l.b16 %v265
    %v303 = vunpack.c.l.b16 %v266
    %v304 = vunpack.c.l.b16 %v267
    %v305 = vunpack.c.l.b16 %v268
    %v306 = vunpack.c.l.b16 %v269
    %v307 = vunpack.c.l.b16 %v270
    %v308 = vunpack.c.l.b16 %v271
    %v309 = vunpack.c.l.b16 %v272
    %v310 = vunpack.c.l.b16 %v273
    %v311 = vunpack.c.l.b16 %v274
    %v312 = vunpack.c.l.b16 %v275
    %v313 = vunpack.c.l.b16 %v276
    %v314 = vunpack.c.l.b16 %v277
    %v315 = vunpack.c.l.b16 %v278
    %v316 = vunpack.c.l.b16 %v279
    %v317 = vpack.c.b16 %v302, %v301
    %v318 = vpack.c.b16 %v304, %v303
    %v319 = vpack.c.b16 %v306, %v305
    %v320 = vpack.c.b16 %v308, %v307
    %v321 = vpack.c.b16 %v310, %v309
    %v322 = vpack.c.b16 %v312, %v311
    %v323 = vpack.c.b16 %v314, %v313
    %v324 = vpack.c.b16 %v316, %v315
    %333 = vmatpush.bf16.msra.mxu0 %v324
    %334 = vmatpush.bf16.msra.mxu0 %v323
    %335 = vmatpush.bf16.msra.mxu0 %v322
    %336 = vmatpush.bf16.msra.mxu0 %v321
    %337 = vmatpush.bf16.msra.mxu0 %v320
    %338 = vmatpush.bf16.msra.mxu0 %v319
    %339 = vmatpush.bf16.msra.mxu0 %v318
    %340 = vmatpush.bf16.msra.mxu0 %v317
    %341 = vmatmul.bf16.gmra.mxu0 %v262
    %v342 = vpop.f32.mrf.mxu0
    %v343 = vadd.f32 %v283, %v342
    %v344 = vpop.f32.mrf.mxu0
    %345 = vdwg.mxu0
    %vm346 = vcmask 31744
    %347 = vst.msk [vmem:[%s3] sm:$0xff] %vm346, %v343
    // Predicated region
    $region26: #{variable_dqn_forward.1} parent=1 // pred_check
      _
    $region27: #{variable_dqn_forward.1} parent=1 // pred_check_branch
      %349 = sbr.rel (0) target = $region29
    $region28: #{variable_dqn_forward.1} parent=1 // pred_region
      _
    $region29: #{variable_dqn_forward.1} parent=1 // pred_fallthru
      _
    // Predicated region
    $region30: #{variable_dqn_forward.1} parent=1 // pred_check
      _
    $region31: #{variable_dqn_forward.1} parent=1 // pred_check_branch
      %351 = sbr.rel (0) target = $region33
    $region32: #{variable_dqn_forward.1} parent=1 // pred_region
      _
    $region33: #{variable_dqn_forward.1} parent=1 // pred_fallthru
      _
    %352 = vsyncpa [#allocation3], 1
    %353 = vsyncpa [#allocation5], 1

</llo_original>
